<compile_context>
chip_gen: v5e
topology: v5e:2x2
jax: 0.10.0
libtpu: 0.0.40
codegen_flags: <defaults>
</compile_context>

<pallas_src>
import jax
import jax.numpy as jnp
from jax.experimental import pallas as pl
from jax.experimental.pallas import tpu as pltpu


def _expand_kernel(x_ref, o_ref):
    # Pure broadcast of the (possibly singleton-axis) input tile to the output
    # tile.  dtypes always match, so no cast.
    o_ref[...] = jnp.broadcast_to(x_ref[...], o_ref.shape)


def _sublane_multiple(dtype) -> int:
    # Full vreg sublane packing: 8 rows for 32-bit, 16 for 16-bit, 32 for 8-bit.
    return max(8, 32 // jnp.dtype(dtype).itemsize)


def _target_block_bytes() -> int:
    # ~1-4 MiB output blocks: large enough to amortize the ~0.35us per-grid-step
    # overhead (>=85% of HBM roofline per measurements), small enough that the
    # double-buffered output stays far inside every generation's default scoped
    # VMEM window (16 MiB v5e, 32 MiB v6e/v7x; 64 MiB physical on v7x).
    try:
        cap = pltpu.get_tpu_info().vmem_capacity_bytes
    except Exception:  # conservative fallback if the query is unavailable
        cap = 64 * 1024 * 1024
    return max(1 << 20, min(4 << 20, cap // 16))


def _collapse(tgt, xs):
    """Merge consecutive dims with identical broadcast behavior; drop size-1
    target dims.  Returns (out_shape, x_shape, full_flags) of equal rank."""
    out_c, x_c, full_c = [], [], []
    for td, xd in zip(tgt, xs):
        if td == 1:
            continue
        full = (xd == td)
        if out_c and full_c[-1] == full:
            out_c[-1] *= td
            x_c[-1] *= xd
        else:
            out_c.append(td)
            x_c.append(xd)
            full_c.append(full)
    return out_c, x_c, full_c


def _lanes_for_flat(total):
    """Largest multiple-of-128 divisor of `total` (capped at 16384), or None."""
    best = None
    c = 128
    while c <= min(total, 16384):
        if total % c == 0:
            best = c
        c += 128
    return best


def _pick_tiles(R, L, itemsize, sub, budget):
    """Pick a (rows, lanes) output tile: lane-dense, sublane-aligned, <= budget."""
    # Lane tile: prefer the full row (contiguous HBM writes); otherwise a large
    # multiple of 128 so stores stay unmasked.
    if L <= 128 or L * itemsize * sub <= budget:
        TL = L
    else:
        TL = max(128, (budget // (sub * itemsize)) // 128 * 128)
    # Row tile: as many sublane-aligned rows as fit in the budget.
    max_rows = max(1, budget // max(1, TL * itemsize))
    TR = (max_rows // sub) * sub
    if TR == 0:
        TR = sub
    TR = min(R, TR)          # TR is a multiple of `sub`, or == R (full dim)
    return TR, TL


def expand_as(x, other):
    """Pallas TPU equivalent of ``x.expand_as(other)`` (arbitrary rank)."""
    tgt = tuple(other.shape)
    if x.ndim > len(tgt):
        raise ValueError(f"expand_as: input rank {x.ndim} > target rank {len(tgt)}")
    xs = (1,) * (len(tgt) - x.ndim) + tuple(x.shape)
    for xd, td in zip(xs, tgt):
        if xd != td and xd != 1:
            raise ValueError(f"expand_as: cannot expand dim of size {xd} to {td}")

    # Identity expand: no data movement needed, skip the kernel entirely.
    if xs == tgt:
        return x.reshape(tgt)

    out_c, x_c, full_c = _collapse(tgt, xs)
    if not out_c:                       # every target dim is 1
        return x.reshape(tgt)

    # Rank-1 collapsed shape => x is effectively a scalar; re-flatten the output
    # into a lane-dense 2D slab so stores are wide and well sublane-packed.
    if len(out_c) == 1:
        total = out_c[0]
        lanes = _lanes_for_flat(total)
        if lanes is None:
            out_c, x_c, full_c = [1, total], [1, 1], [False, False]
        else:
            out_c, x_c, full_c = [total // lanes, lanes], [1, 1], [False, False]

    G = len(out_c)
    R, L = out_c[-2], out_c[-1]
    itemsize = jnp.dtype(x.dtype).itemsize
    sub = _sublane_multiple(x.dtype)
    budget = _target_block_bytes()
    TR, TL = _pick_tiles(R, L, itemsize, sub, budget)

    n_lead = G - 2
    grid = tuple(out_c[:n_lead]) + (pl.cdiv(R, TR), pl.cdiv(L, TL))

    out_bytes = itemsize
    for d in out_c:
        out_bytes *= d
    total_steps = 1
    for g in grid:
        total_steps *= g

    # For large single-block outputs, split into >=2 parallel grid steps so both
    # TensorCores on a v7x chip (megacore) can share the store bandwidth.
    if total_steps == 1 and out_bytes > (2 << 20):
        if R > sub:
            TR = max(sub, (pl.cdiv(R, 2) // sub) * sub)
        elif L > 256:
            TL = max(128, (pl.cdiv(L, 2) // 128) * 128)
        grid = tuple(out_c[:n_lead]) + (pl.cdiv(R, TR), pl.cdiv(L, TL))

    out_block = (1,) * n_lead + (TR, TL)
    x_block = (1,) * n_lead + (TR if full_c[-2] else 1, TL if full_c[-1] else 1)
    full_flags = tuple(full_c)

    def out_index_map(*idx):
        return idx

    def x_index_map(*idx):
        return tuple(i if f else 0 for i, f in zip(idx, full_flags))

    x_elems = 1
    for d in x_c:
        x_elems *= d
    cost = pl.CostEstimate(
        flops=0,
        transcendentals=0,
        bytes_accessed=out_bytes + x_elems * itemsize,
    )

    out_flat = pl.pallas_call(
        _expand_kernel,
        out_shape=jax.ShapeDtypeStruct(tuple(out_c), x.dtype),
        grid_spec=pltpu.PrefetchScalarGridSpec(
            num_scalar_prefetch=0,
            grid=grid,
            in_specs=[pl.BlockSpec(x_block, x_index_map)],
            out_specs=pl.BlockSpec(out_block, out_index_map),
        ),
        compiler_params=pltpu.CompilerParams(
            dimension_semantics=("parallel",) * len(grid)),
        cost_estimate=cost,
    )(x.reshape(tuple(x_c)))

    return out_flat.reshape(tgt)


if __name__ == "__main__":
    key = jax.random.PRNGKey(0)
    k1, k2 = jax.random.split(key)

    # Primary case from the module: x_in (N, C, 1, 1) expanded to other's shape.
    N, C, H, W = 2, 4, 16, 16
    x_in = jax.random.normal(k1, (N, C, 1, 1), dtype=jnp.float32)
    other = jax.random.normal(k2, (N, C, H, W), dtype=jnp.float32)

    out = jax.block_until_ready(expand_as(x_in, other))
    ref = jnp.broadcast_to(x_in, other.shape)
    assert out.shape == other.shape
    assert out.dtype == x_in.dtype
    assert jnp.array_equal(out, ref)

    # Additional broadcast patterns exercising the generic / previously
    # unsupported paths (partial broadcasts, non-multiple-of-8 rows, scalar).
    checks = [
        ((1, 1, H, W), (N, C, H, W)),    # broadcast leading dims
        ((N, 1, H, W), (N, C, H, W)),    # partial broadcast (rank-3 collapsed)
        ((N, C, H, 1), (N, C, H, W)),    # broadcast last dim only
        ((1, 1, 1, 1), (N, C, H, W)),    # scalar broadcast
        ((3, 4, 1, 1), (3, 4, H, W)),    # rows not a multiple of 8
        ((N, C, H, W), (N, C, H, W)),    # identity short-circuit
    ]
    for i, (xsh, tsh) in enumerate(checks):
        kx = jax.random.PRNGKey(i + 1)
        xi = jax.random.normal(kx, xsh, dtype=jnp.float32)
        ti = jnp.zeros(tsh, dtype=jnp.float32)
        oi = jax.block_until_ready(expand_as(xi, ti))
        assert jnp.array_equal(oi, jnp.broadcast_to(xi, tsh)), (xsh, tsh)

    print("KERNEL_OK")
</pallas_src>

<mosaic_0001>
module attributes {stable_mosaic.version = 11 : i64} {
  func.func @_expand_kernel(%arg0: i32, %arg1: i32, %arg2: memref<8x1xf32, #tpu.memory_space<vmem>>, %arg3: memref<8x256xf32, #tpu.memory_space<vmem>>) attributes {dimension_semantics = [#tpu.dimension_semantics<parallel>, #tpu.dimension_semantics<parallel>], iteration_bounds = array<i64: 1, 1>, scalar_prefetch = 0 : i64, scratch_operands = 0 : i64, tpu.core_type = #tpu.core_type<tc>, window_params = [{transform_indices = @transform_0, window_bounds = array<i64: 8, 1>}, {transform_indices = @transform_1, window_bounds = array<i64: 8, 256>}]} {
    %c0 = arith.constant 0 : index
    %c0_0 = arith.constant 0 : index
    %0 = vector.load %arg2[%c0, %c0_0] : memref<8x1xf32, #tpu.memory_space<vmem>>, vector<8x1xf32>
    %1 = vector.shape_cast %0 : vector<8x1xf32> to vector<8x1xf32>
    %2 = vector.broadcast %1 : vector<8x1xf32> to vector<8x256xf32>
    %c0_1 = arith.constant 0 : index
    %c0_2 = arith.constant 0 : index
    %3 = vector.load %arg3[%c0_1, %c0_2] : memref<8x256xf32, #tpu.memory_space<vmem>>, vector<8x256xf32>
    tpu.vector_store %arg3[%c0_1, %c0_2], %2 {strides = array<i32>} : memref<8x256xf32, #tpu.memory_space<vmem>>, vector<8x256xf32>,
    return
  }
  func.func @transform_0(%arg0: i32, %arg1: i32) -> (i32, i32) {
    %c0_i32 = arith.constant 0 : i32
    %c0_i32_0 = arith.constant 0 : i32
    return %arg0, %c0_i32 : i32, i32
  }
  func.func @transform_1(%arg0: i32, %arg1: i32) -> (i32, i32) {
    %c0_i32 = arith.constant 0 : i32
    return %arg0, %arg1 : i32, i32
  }
}

</mosaic_0001>

<llo_original>
// kernel: tpu_custom_call.1
$region0: #{tpu_custom_call.1}
  #allocation0 [shape = 'u32[]', space=smem, size = 0x4, offset = 0x4, fixed_abs, tag = 'smem constant byte address 0x4 - core index']
  #allocation1 [shape = 'u32[72,128]{1,0:T(1,128)}', space=vmem, size = 0x9000, scoped, tag = 'internal scratch']
  %s0 = inlined_call_operand.vmem [shape: f32[8,1], index: 0, kind: input, shape index: {}]
  %s1 = inlined_call_operand.hbm [shape: f32[8,256], index: 1, kind: output, shape index: {}]
  %s2 = sld [smem:[#allocation0]]
  $region14: #{tpu_custom_call.1} parent=0
    _
  %s4 = ssub.s32 1, %s2
  %s5 = scalar_select 0, %s4, %s2
  $region1: #{tpu_custom_call.1} parent=0
    #allocation2 [shape = 'u8[8192]{0}', space=vmem, size = 0x2000, scoped, tag = 'output window, operand 0, single buffered']
    #allocation3 [shape = 's32[1]{0}', space=sflag, size = 0x4, scoped, tag = 'scoped memory for tpu_custom_call.1']
    %6 = vsyncpa [#allocation3], 0
    // Predicated region
    $region2: #{tpu_custom_call.1} parent=1 // pred_check
      _
    $region3: #{tpu_custom_call.1} parent=1 // pred_check_branch
      %8 = sbr.rel (0) target = $region5
    $region4: #{tpu_custom_call.1} parent=1 // pred_region
      _
    $region5: #{tpu_custom_call.1} parent=1 // pred_fallthru
      _
    %v9 = vld [vmem:[%s0] sm:$0xff]
    %11 = vset.pattern.permute.xlu0 0
    %12 = vperm.xlu0 %11, %v9
    %v13 = vpop.permute.xlu0 %12
    %15 = vst [vmem:[#allocation2] sm:$0xff] %v13
    %16 = vst [vmem:[#allocation2 + $0x8] sm:$0xff] %v13
    // Predicated region
    $region6: #{tpu_custom_call.1} parent=1 // pred_check
      _
    $region7: #{tpu_custom_call.1} parent=1 // pred_check_branch
      %18 = sbr.rel (0) target = $region9
    $region8: #{tpu_custom_call.1} parent=1 // pred_region
      %20 = vsyncadd [#allocation3], 0
      %s22 = sshll.u32 [#allocation2], 4
      %s23 = int_to_ptr.vmem [resolvable:$true] %s22
      %s24 = sshll.u32 %s1, 4
      %s25 = int_to_ptr.hbm [resolvable:$true] %s24
      %27 = dma.vmem_to_hbm [thread:$0]  %s23, 256, %s25, [#allocation3]
    $region9: #{tpu_custom_call.1} parent=1 // pred_fallthru
      _
    // Predicated region
    $region10: #{tpu_custom_call.1} parent=1 // pred_check
      _
    $region11: #{tpu_custom_call.1} parent=1 // pred_check_branch
      %29 = sbr.rel (0) target = $region13
    $region12: #{tpu_custom_call.1} parent=1 // pred_region
      %31 = dma.done [#allocation3], 256
    $region13: #{tpu_custom_call.1} parent=1 // pred_fallthru
      _
    %32 = vsyncpa [#allocation3], 1

</llo_original>
